<compile_context>
chip_gen: v6e
topology: v6e:2x2x1
jax: 0.10.0
libtpu: 0.0.40
codegen_flags: <defaults>
</compile_context>

<pallas_src>
import functools

import jax
import jax.numpy as jnp
from jax.experimental import pallas as pl
from jax.experimental.pallas import tpu as pltpu

LANE = 128     # lane width
MAX_TM = 2048  # sublane rows per grid step -> 2048*128*4B = 1 MiB / input block


def _int_power(x, n):
    """x**n for a static non-negative integer n (exponentiation by squaring, VALU only)."""
    if n == 0:
        return jnp.ones_like(x)
    result = None
    base = x
    while n > 0:
        if n & 1:
            result = base if result is None else result * base
        n >>= 1
        if n:
            base = base * base
    return result


def _focal_loss_kernel(x_ref, t_ref, out_ref, *, gamma, smoothing, n_valid,
                       block_elems, apply_mask):
    x = x_ref[...].astype(jnp.float32)
    t = t_ref[...].astype(jnp.float32)

    if smoothing:  # matches PyTorch `if self.smoothing:` (falsy 0.0 / None skip)
        t = t * (1.0 - smoothing)

    # Stable BCE-with-logits; algebraically identical to the PyTorch expression
    #   x - x*t + max(-x,0) + log(exp(-max) + exp(-x-max))  ==  x - x*t + softplus(-x)
    # with softplus(-x) = max(-x,0) + log(1 + exp(-|x|))   -> 1 exp + 1 log.
    bce = x - x * t + jnp.maximum(-x, 0.0) + jnp.log(1.0 + jnp.exp(-jnp.abs(x)))

    # Focal modulation: exp(gamma * logsigmoid(w)) == sigmoid(w)**gamma, w = -x*(2t-1)
    w = -x * (t * 2.0 - 1.0)
    g = float(gamma)
    if g == int(g) and 0 <= int(g) <= 16:
        # Integer gamma: 1 exp + 1 reciprocal (exact), power is pure VALU multiplies.
        sig = pl.reciprocal(1.0 + jnp.exp(-w))
        mod = _int_power(sig, int(g))
    else:
        # General gamma: exp(-gamma * softplus(-w))  -> 2 exp + 1 log.
        sp = jnp.maximum(-w, 0.0) + jnp.log(1.0 + jnp.exp(-jnp.abs(w)))
        mod = jnp.exp(-g * sp)

    loss = mod * bce

    if apply_mask:
        # Only compiled in when the flattened array was padded; cheap VALU filler
        # (iota + compare + select) in a memory-bound kernel.
        i = pl.program_id(0)
        row = jax.lax.broadcasted_iota(jnp.int32, loss.shape, 0)
        col = jax.lax.broadcasted_iota(jnp.int32, loss.shape, 1)
        flat_idx = i * block_elems + row * LANE + col
        loss = jnp.where(flat_idx < n_valid, loss, 0.0)

    # Fold (TM, 128) -> (8, 128) with pure VALU adds; the cross-lane/sublane
    # reduce happens once, in the wrapper, over the tiny partial-sum output.
    tm = loss.shape[0]
    out_ref[...] = loss.reshape(tm // 8, 8, LANE).sum(axis=0)


def focal_loss(x, target, *, gamma, smoothing=None):
    assert x.shape == target.shape, (
        f"Target size ({target.shape}) must be the same as input size ({x.shape})"
    )
    n_valid = int(x.size)

    rows = -(-n_valid // LANE)                 # ceil(n / 128)
    rows8 = max(8, ((rows + 7) // 8) * 8)      # round up to sublane multiple
    tm = min(MAX_TM, rows8)                    # rows per block (multiple of 8)
    chunk = tm * LANE
    padded = -(-n_valid // chunk) * chunk
    pad = padded - n_valid

    xf = jnp.ravel(x)
    tf = jnp.ravel(target)
    if pad:
        # TODO(synk): tail padding still copies the full flat array; a ragged last
        # block handled entirely in-kernel (pl.ANY + manual DMA) would avoid it.
        xf = jnp.pad(xf, (0, pad))
        tf = jnp.pad(tf, (0, pad))

    M = padded // LANE
    x2 = xf.reshape(M, LANE)
    t2 = tf.reshape(M, LANE)
    num_blocks = M // tm

    kernel = functools.partial(
        _focal_loss_kernel,
        gamma=float(gamma),
        smoothing=(float(smoothing) if smoothing else None),
        n_valid=n_valid,
        block_elems=chunk,
        apply_mask=bool(pad),
    )

    partials = pl.pallas_call(
        kernel,
        out_shape=jax.ShapeDtypeStruct((num_blocks * 8, LANE), jnp.float32),
        grid_spec=pltpu.PrefetchScalarGridSpec(
            num_scalar_prefetch=0,
            grid=(num_blocks,),
            in_specs=[
                pl.BlockSpec((tm, LANE), lambda i: (i, 0)),
                pl.BlockSpec((tm, LANE), lambda i: (i, 0)),
            ],
            out_specs=pl.BlockSpec((8, LANE), lambda i: (i, 0)),
        ),
        compiler_params=pltpu.CompilerParams(
            dimension_semantics=("parallel",),
        ),
    )(x2, t2)

    # Final cross-lane reduce + mean on the tiny partial-sum array.
    return jnp.sum(partials) / n_valid


def focal_loss_ref(x, target, *, gamma, smoothing=None):
    """Pure-JAX reference mirroring the PyTorch module exactly."""
    x = x.astype(jnp.float32)
    t = target.astype(jnp.float32)
    if smoothing:
        t = t * (1.0 - smoothing)
    max_val = jnp.maximum(-x, 0.0)
    loss = x - x * t + max_val + jnp.log(jnp.exp(-max_val) + jnp.exp(-x - max_val))
    invprobs = jax.nn.log_sigmoid(-x * (t * 2.0 - 1.0))
    loss = jnp.exp(invprobs * gamma) * loss
    return jnp.mean(loss)


if __name__ == "__main__":
    # Module "parameters" (constructor args), set deterministically in-script.
    gamma = 2.0
    smoothing = 0.1

    key = jax.random.PRNGKey(0)
    k1, k2 = jax.random.split(key)
    # NCHW logits and binary targets, small shape.
    x = jax.random.normal(k1, (2, 4, 16, 16), dtype=jnp.float32)
    target = jax.random.bernoulli(k2, 0.5, (2, 4, 16, 16)).astype(jnp.float32)

    out = focal_loss(x, target, gamma=gamma, smoothing=smoothing)
    out = jax.block_until_ready(out)

    ref = focal_loss_ref(x, target, gamma=gamma, smoothing=smoothing)
    assert jnp.allclose(out, ref, rtol=1e-5, atol=1e-5), (out, ref)

    print("KERNEL_OK")
</pallas_src>

<mosaic_0001>
module attributes {stable_mosaic.version = 11 : i64} {
  func.func @_focal_loss_kernel(%arg0: i32, %arg1: memref<16x128xf32, #tpu.memory_space<vmem>>, %arg2: memref<16x128xf32, #tpu.memory_space<vmem>>, %arg3: memref<8x128xf32, #tpu.memory_space<vmem>>) attributes {dimension_semantics = [#tpu.dimension_semantics<parallel>], iteration_bounds = array<i64: 1>, scalar_prefetch = 0 : i64, scratch_operands = 0 : i64, tpu.core_type = #tpu.core_type<tc>, window_params = [{transform_indices = @transform_0, window_bounds = array<i64: 16, 128>}, {transform_indices = @transform_1, window_bounds = array<i64: 16, 128>}, {transform_indices = @transform_2, window_bounds = array<i64: 8, 128>}]} {
    %c0 = arith.constant 0 : index
    %c0_0 = arith.constant 0 : index
    %0 = vector.load %arg1[%c0, %c0_0] : memref<16x128xf32, #tpu.memory_space<vmem>>, vector<16x128xf32>
    %c0_1 = arith.constant 0 : index
    %c0_2 = arith.constant 0 : index
    %1 = vector.load %arg2[%c0_1, %c0_2] : memref<16x128xf32, #tpu.memory_space<vmem>>, vector<16x128xf32>
    %cst = arith.constant 0.899999976 : f32
    %2 = vector.broadcast %cst : f32 to vector<16x128xf32>
    %3 = arith.mulf %1, %2 : vector<16x128xf32>
    %4 = arith.mulf %0, %3 : vector<16x128xf32>
    %5 = arith.subf %0, %4 : vector<16x128xf32>
    %cst_3 = arith.constant 0.000000e+00 : f32
    %6 = vector.broadcast %cst_3 : f32 to vector<16x128xf32>
    %7 = arith.subf %6, %0 : vector<16x128xf32>
    %cst_4 = arith.constant 0.000000e+00 : f32
    %8 = vector.broadcast %cst_4 : f32 to vector<16x128xf32>
    %9 = arith.maximumf %7, %8 : vector<16x128xf32>
    %10 = arith.addf %5, %9 : vector<16x128xf32>
    %11 = math.absf %0 : vector<16x128xf32>
    %cst_5 = arith.constant 0.000000e+00 : f32
    %12 = vector.broadcast %cst_5 : f32 to vector<16x128xf32>
    %13 = arith.subf %12, %11 : vector<16x128xf32>
    %14 = math.exp %13 : vector<16x128xf32>
    %cst_6 = arith.constant 1.000000e+00 : f32
    %15 = vector.broadcast %cst_6 : f32 to vector<16x128xf32>
    %16 = arith.addf %15, %14 : vector<16x128xf32>
    %17 = math.log %16 : vector<16x128xf32>
    %18 = arith.addf %10, %17 : vector<16x128xf32>
    %cst_7 = arith.constant 0.000000e+00 : f32
    %19 = vector.broadcast %cst_7 : f32 to vector<16x128xf32>
    %20 = arith.subf %19, %0 : vector<16x128xf32>
    %cst_8 = arith.constant 2.000000e+00 : f32
    %21 = vector.broadcast %cst_8 : f32 to vector<16x128xf32>
    %22 = arith.mulf %3, %21 : vector<16x128xf32>
    %cst_9 = arith.constant 1.000000e+00 : f32
    %23 = vector.broadcast %cst_9 : f32 to vector<16x128xf32>
    %24 = arith.subf %22, %23 : vector<16x128xf32>
    %25 = arith.mulf %20, %24 : vector<16x128xf32>
    %cst_10 = arith.constant 0.000000e+00 : f32
    %26 = vector.broadcast %cst_10 : f32 to vector<16x128xf32>
    %27 = arith.subf %26, %25 : vector<16x128xf32>
    %28 = math.exp %27 : vector<16x128xf32>
    %cst_11 = arith.constant 1.000000e+00 : f32
    %29 = vector.broadcast %cst_11 : f32 to vector<16x128xf32>
    %30 = arith.addf %29, %28 : vector<16x128xf32>
    %31 = tpu.reciprocal %30 : vector<16x128xf32> -> vector<16x128xf32>
    %32 = arith.mulf %31, %31 : vector<16x128xf32>
    %33 = arith.mulf %32, %18 : vector<16x128xf32>
    %34 = vector.shape_cast %33 : vector<16x128xf32> to vector<2x8x128xf32>
    %cst_12 = arith.constant dense<0.000000e+00> : vector<8x128xf32>
    %35 = vector.multi_reduction <add>, %34, %cst_12 [0] : vector<2x8x128xf32> to vector<8x128xf32>
    %c0_13 = arith.constant 0 : index
    %c0_14 = arith.constant 0 : index
    %36 = vector.load %arg3[%c0_13, %c0_14] : memref<8x128xf32, #tpu.memory_space<vmem>>, vector<8x128xf32>
    tpu.vector_store %arg3[%c0_13, %c0_14], %35 {strides = array<i32>} : memref<8x128xf32, #tpu.memory_space<vmem>>, vector<8x128xf32>,
    return
  }
  func.func @transform_0(%arg0: i32) -> (i32, i32) {
    %c0_i32 = arith.constant 0 : i32
    %c0_i32_0 = arith.constant 0 : i32
    return %arg0, %c0_i32 : i32, i32
  }
  func.func @transform_1(%arg0: i32) -> (i32, i32) {
    %c0_i32 = arith.constant 0 : i32
    %c0_i32_0 = arith.constant 0 : i32
    return %arg0, %c0_i32 : i32, i32
  }
  func.func @transform_2(%arg0: i32) -> (i32, i32) {
    %c0_i32 = arith.constant 0 : i32
    %c0_i32_0 = arith.constant 0 : i32
    return %arg0, %c0_i32 : i32, i32
  }
}

</mosaic_0001>

<llo_original>
// kernel: tpu_custom_call.1
$region0: #{tpu_custom_call.1}
  #allocation0 [shape = 'u32[]', space=smem, size = 0x4, offset = 0x4, fixed_abs, tag = 'smem constant byte address 0x4 - core index']
  #allocation1 [shape = 'u32[144,128]{1,0:T(1,128)}', space=vmem, size = 0x12000, scoped, tag = 'internal scratch']
  %s0 = inlined_call_operand.hbm [shape: f32[16,128], index: 0, kind: input, shape index: {}]
  %s1 = inlined_call_operand.hbm [shape: f32[16,128], index: 1, kind: input, shape index: {}]
  %s2 = inlined_call_operand.hbm [shape: f32[8,128], index: 2, kind: output, shape index: {}]
  %s3 = sld [smem:[#allocation0]]
  $region26: #{tpu_custom_call.1} parent=0
    _
  %s5 = ssub.s32 1, %s3
  %s6 = scalar_select 0, %s5, %s3
  $region1: #{tpu_custom_call.1} parent=0
    #allocation2 [shape = 'u8[8192]{0}', space=vmem, size = 0x2000, scoped, tag = 'input window, operand 0, single buffered']
    #allocation3 [shape = 's32[1]{0}', space=sflag, size = 0x4, scoped, tag = 'scoped memory for tpu_custom_call.1']
    #allocation4 [shape = 's32[1]{0}', space=sflag, size = 0x4, scoped, tag = 'scoped memory for tpu_custom_call.1']
    #allocation5 [shape = 'u8[8192]{0}', space=vmem, size = 0x2000, scoped, tag = 'input window, operand 1, single buffered']
    #allocation6 [shape = 's32[1]{0}', space=sflag, size = 0x4, scoped, tag = 'scoped memory for tpu_custom_call.1']
    #allocation7 [shape = 'u8[4096]{0}', space=vmem, size = 0x1000, scoped, tag = 'output window, operand 0, single buffered']
    %7 = vsyncpa [#allocation3], 0
    %8 = vsyncpa [#allocation6], 0
    %9 = vsyncpa [#allocation4], 0
    // Predicated region
    $region2: #{tpu_custom_call.1} parent=1 // pred_check
      _
    $region3: #{tpu_custom_call.1} parent=1 // pred_check_branch
      %11 = sbr.rel (0) target = $region5
    $region4: #{tpu_custom_call.1} parent=1 // pred_region
      %s13 = ssub.s32 256, 256
      %14 = vsyncadd [#allocation3], %s13
      %s15 = sshll.u32 [#allocation2], 4
      %s16 = int_to_ptr.vmem [resolvable:$true] %s15
      %21 = dma.hbm_to_vmem [thread:$0]  %s0, 256, %s16, [#allocation3], 128, 128, 8
    $region5: #{tpu_custom_call.1} parent=1 // pred_fallthru
      _
    // Predicated region
    $region6: #{tpu_custom_call.1} parent=1 // pred_check
      _
    $region7: #{tpu_custom_call.1} parent=1 // pred_check_branch
      %23 = sbr.rel (0) target = $region9
    $region8: #{tpu_custom_call.1} parent=1 // pred_region
      %s25 = ssub.s32 256, 256
      %26 = vsyncadd [#allocation6], %s25
      %s27 = sshll.u32 [#allocation5], 4
      %s28 = int_to_ptr.vmem [resolvable:$true] %s27
      %33 = dma.hbm_to_vmem [thread:$0]  %s1, 256, %s28, [#allocation6], 128, 128, 8
    $region9: #{tpu_custom_call.1} parent=1 // pred_fallthru
      _
    // Predicated region
    $region10: #{tpu_custom_call.1} parent=1 // pred_check
      _
    $region11: #{tpu_custom_call.1} parent=1 // pred_check_branch
      %35 = sbr.rel (0) target = $region13
    $region12: #{tpu_custom_call.1} parent=1 // pred_region
      %36 = dma.done [#allocation3], 256
    $region13: #{tpu_custom_call.1} parent=1 // pred_fallthru
      _
    // Predicated region
    $region14: #{tpu_custom_call.1} parent=1 // pred_check
      _
    $region15: #{tpu_custom_call.1} parent=1 // pred_check_branch
      %38 = sbr.rel (0) target = $region17
    $region16: #{tpu_custom_call.1} parent=1 // pred_region
      %39 = dma.done [#allocation6], 256
    $region17: #{tpu_custom_call.1} parent=1 // pred_fallthru
      _
    %v40 = vld [vmem:[#allocation2] sm:$0xff]
    %v41 = vld [vmem:[#allocation2 + $0x8] sm:$0xff]
    %v42 = vld [vmem:[#allocation5] sm:$0xff]
    %v43 = vld [vmem:[#allocation5 + $0x8] sm:$0xff]
    %v44 = vmul.f32 %v42, 0.9
    %v45 = vmul.f32 %v43, 0.9
    %v46 = vmul.f32 %v40, %v44
    %v47 = vmul.f32 %v41, %v45
    %v48 = vsub.f32 %v40, %v46
    %v49 = vsub.f32 %v41, %v47
    %v50 = vsub.f32 0.0, %v40
    %v51 = vsub.f32 0.0, %v41
    %v52 = vmax.f32 %v50, 0.0
    %v53 = vmax.f32 %v51, 0.0
    %v54 = vadd.f32 %v48, %v52
    %v55 = vadd.f32 %v49, %v53
    %v56 = vand.u32 2147483647, %v40
    %v57 = vand.u32 2147483647, %v41
    %v58 = vsub.f32 0.0, %v56
    %v59 = vsub.f32 0.0, %v57
    %v60 = vmul.f32 %v58, 1.442695
    %v61 = vpow.pop %v60
    %v62 = vmul.f32 %v59, 1.442695
    %v63 = vpow.pop %v62
    %v64 = vadd.f32 %v61, 1.0
    %v65 = vadd.f32 %v63, 1.0
    %v66 = vlog2.pop %v64
    %v67 = vmul.f32 %v66, 0.6931472
    %v68 = vlog2.pop %v65
    %v69 = vmul.f32 %v68, 0.6931472
    %v70 = vadd.f32 %v54, %v67
    %v71 = vadd.f32 %v55, %v69
    %v72 = vmul.f32 %v44, 2.0
    %v73 = vmul.f32 %v45, 2.0
    %v74 = vsub.f32 %v72, 1.0
    %v75 = vsub.f32 %v73, 1.0
    %v76 = vmul.f32 %v50, %v74
    %v77 = vmul.f32 %v51, %v75
    %v78 = vsub.f32 0.0, %v76
    %v79 = vsub.f32 0.0, %v77
    %v80 = vmul.f32 %v78, 1.442695
    %v81 = vpow.pop %v80
    %v82 = vmul.f32 %v79, 1.442695
    %v83 = vpow.pop %v82
    %v84 = vadd.f32 %v81, 1.0
    %v85 = vadd.f32 %v83, 1.0
    %v86 = vrcp.pop %v84
    %v87 = vrcp.pop %v85
    %v88 = vmul.f32 %v86, %v86
    %v89 = vmul.f32 %v87, %v87
    %v90 = vmul.f32 %v88, %v70
    %v91 = vmul.f32 %v89, %v71
    %v92 = vadd.f32 %v90, %v91
    %93 = vst [vmem:[#allocation7] sm:$0xff] %v92
    // Predicated region
    $region18: #{tpu_custom_call.1} parent=1 // pred_check
      _
    $region19: #{tpu_custom_call.1} parent=1 // pred_check_branch
      %95 = sbr.rel (0) target = $region21
    $region20: #{tpu_custom_call.1} parent=1 // pred_region
      %s97 = ssub.s32 128, 128
      %98 = vsyncadd [#allocation4], %s97
      %s100 = sshll.u32 [#allocation7], 4
      %s101 = int_to_ptr.vmem [resolvable:$true] %s100
      %103 = dma.vmem_to_hbm [thread:$0]  %s101, 128, %s2, [#allocation4]
    $region21: #{tpu_custom_call.1} parent=1 // pred_fallthru
      _
    // Predicated region
    $region22: #{tpu_custom_call.1} parent=1 // pred_check
      _
    $region23: #{tpu_custom_call.1} parent=1 // pred_check_branch
      %105 = sbr.rel (0) target = $region25
    $region24: #{tpu_custom_call.1} parent=1 // pred_region
      %106 = dma.done [#allocation4], 128
    $region25: #{tpu_custom_call.1} parent=1 // pred_fallthru
      _
    %107 = vsyncpa [#allocation3], 1
    %108 = vsyncpa [#allocation6], 1
    %109 = vsyncpa [#allocation4], 1

</llo_original>
